<compile_context>
chip_gen: v6e
topology: v6e:2x2x1
jax: 0.10.0
libtpu: 0.0.40
codegen_flags: <defaults>
</compile_context>

<pallas_src>
import functools

import jax
import jax.numpy as jnp
import numpy as np
from jax import lax
from jax.experimental import pallas as pl
from jax.experimental.pallas import tpu as pltpu


# ---------------------------------------------------------------------------
# Hardware-aware budgets
# ---------------------------------------------------------------------------
def _hw_budgets():
    """Generation-aware VMEM budgets (v5e/v6e: 128 MiB physical, v7x: 64 MiB)."""
    cap = 64 * 1024 * 1024  # conservative default (v7x per-TC)
    try:
        cap = int(pltpu.get_tpu_info().vmem_capacity_bytes)
    except Exception:
        pass
    if cap >= 128 * 1024 * 1024:          # v5e / v6e
        return dict(vmem_limit=64 << 20, tile_budget=6 << 20, fast_budget=44 << 20)
    # v7x (64 MiB physical per TC) or unknown
    return dict(vmem_limit=32 << 20, tile_budget=4 << 20, fast_budget=22 << 20)


def _largest_tile(dim, unit, cap):
    """Largest multiple of `unit` that divides `dim` and is <= cap.

    If `dim` is not a multiple of `unit`, fall back to the full dimension
    (a full-extent block is always a legal BlockSpec block)."""
    if dim % unit != 0:
        return dim
    cap = max(unit, min(cap, dim))
    best = unit
    t = unit
    while t <= cap:
        if dim % t == 0:
            best = t
        t += unit
    return best


# ---------------------------------------------------------------------------
# Kernels
# ---------------------------------------------------------------------------
def _fused_kernel(x_ref, g_ref, b_ref, mm_ref, mv_ref,
                  y_ref, nmm_ref, nmv_ref,
                  *, reduce_axes, inv_m, eps, momentum):
    """Single-call fast path: x resident in VMEM; stats + normalize fused."""
    x = x_ref[...].astype(jnp.float32)
    s = x
    sq = x * x
    for ax in reduce_axes:                      # sequential single-axis reduces
        s = jnp.sum(s, axis=ax, keepdims=True)
        sq = jnp.sum(sq, axis=ax, keepdims=True)
    mean = s * inv_m
    # Biased (divide-by-M) variance, matching the d2l reference module.
    var = jnp.maximum(sq * inv_m - mean * mean, 0.0)
    scale = g_ref[...] * lax.rsqrt(var + eps)
    shift = b_ref[...] - mean * scale
    y_ref[...] = (x * scale + shift).astype(y_ref.dtype)
    nmm_ref[...] = momentum * mm_ref[...] + (1.0 - momentum) * mean
    nmv_ref[...] = momentum * mv_ref[...] + (1.0 - momentum) * var


def _stats_rows_kernel(x_ref, sum_ref, sumsq_ref, acc_s, acc_q, *, lane_groups):
    """Tiled pass 1 (NCHW path, x viewed as (N*C, S)).

    Accumulate lane-wide (Rb, 128) partial sum / sum-of-squares across the
    reduction grid axis with pure elementwise adds; the single cross-lane
    reduce happens only in the finalize, writing (Rb, 1) per-row partials."""
    j = pl.program_id(1)

    @pl.when(j == 0)
    def _init():
        acc_s[...] = jnp.zeros_like(acc_s)
        acc_q[...] = jnp.zeros_like(acc_q)

    x = x_ref[...].astype(jnp.float32)          # (Rb, ts)
    if lane_groups <= 1:
        ps = x
        pq = x * x
    else:
        ps = jnp.zeros(acc_s.shape, jnp.float32)
        pq = jnp.zeros(acc_q.shape, jnp.float32)
        for g in range(lane_groups):            # static 128-lane-group slices
            xg = x[:, g * 128:(g + 1) * 128]
            ps = ps + xg
            pq = pq + xg * xg
    acc_s[...] += ps
    acc_q[...] += pq

    @pl.when(j == pl.num_programs(1) - 1)
    def _finalize():
        sum_ref[...] = jnp.sum(acc_s[...], axis=1, keepdims=True)
        sumsq_ref[...] = jnp.sum(acc_q[...], axis=1, keepdims=True)


def _stats_cols_kernel(x_ref, sum_ref, sumsq_ref, acc_s, acc_q):
    """Tiled pass 1 for (N, C) inputs: reduce over rows into a (1, tc) acc."""
    i = pl.program_id(1)                        # row-block (reduction) axis

    @pl.when(i == 0)
    def _init():
        acc_s[...] = jnp.zeros_like(acc_s)
        acc_q[...] = jnp.zeros_like(acc_q)

    x = x_ref[...].astype(jnp.float32)          # (tm, tc)
    acc_s[...] += jnp.sum(x, axis=0, keepdims=True)
    acc_q[...] += jnp.sum(x * x, axis=0, keepdims=True)

    @pl.when(i == pl.num_programs(1) - 1)
    def _finalize():
        sum_ref[...] = acc_s[...]
        sumsq_ref[...] = acc_q[...]


def _affine_kernel(x_ref, scale_ref, shift_ref, y_ref):
    """Tiled pass 2: y = x * scale + shift (broadcast over lanes or sublanes)."""
    x = x_ref[...].astype(jnp.float32)
    y_ref[...] = (x * scale_ref[...] + shift_ref[...]).astype(y_ref.dtype)


# ---------------------------------------------------------------------------
# Drivers
# ---------------------------------------------------------------------------
def _batch_norm_fused(x_nd, param_shape, reduce_axes, g, b, mm, mv,
                      eps, momentum, vmem_limit):
    inv_m = 1.0 / float(np.prod([x_nd.shape[a] for a in reduce_axes]))
    c_shape = jax.ShapeDtypeStruct(param_shape, jnp.float32)
    y, nmm, nmv = pl.pallas_call(
        functools.partial(_fused_kernel, reduce_axes=reduce_axes,
                          inv_m=inv_m, eps=eps, momentum=momentum),
        out_shape=(jax.ShapeDtypeStruct(x_nd.shape, x_nd.dtype), c_shape, c_shape),
        compiler_params=pltpu.CompilerParams(vmem_limit_bytes=vmem_limit),
    )(x_nd, g, b, mm, mv)
    return y, nmm, nmv


def _batch_norm_4d_tiled(x, gamma, beta, mm, mv, eps, momentum,
                         tile_budget, vmem_limit):
    N, C, H, W = x.shape
    S = H * W
    R = N * C
    x2 = x.reshape(R, S)                        # free view: sublanes=(n,c), lanes=spatial
    esize = np.dtype(x.dtype).itemsize
    budget_elems = max(8 * 128, tile_budget // esize)

    # Lane tile (multiple of 128 when possible; capped so the per-step
    # lane-group unroll stays small), then spend the rest of the budget on rows.
    ts = _largest_tile(S, 128, min(2048, max(128, budget_elems // 8)))
    rb = _largest_tile(R, 8, max(8, budget_elems // ts))
    if ts % 128 == 0 and ts > 128:
        lane_groups, acc_w = ts // 128, 128
    else:
        lane_groups, acc_w = 1, ts

    grid = (R // rb, S // ts)
    x_spec = pl.BlockSpec((rb, ts), lambda i, j: (i, j))
    r1_spec = pl.BlockSpec((rb, 1), lambda i, j: (i, 0))
    part_shape = jax.ShapeDtypeStruct((R, 1), jnp.float32)

    # Pass 1: per-row partial sums (row-block axis parallel -> megacore on v7x).
    # NOTE: pl.Buffered(3) on x_spec could be added if profiling shows exposed DMA.
    row_sum, row_sumsq = pl.pallas_call(
        functools.partial(_stats_rows_kernel, lane_groups=lane_groups),
        grid=grid,
        in_specs=[x_spec],
        out_specs=(r1_spec, r1_spec),
        out_shape=(part_shape, part_shape),
        scratch_shapes=[pltpu.VMEM((rb, acc_w), jnp.float32),
                        pltpu.VMEM((rb, acc_w), jnp.float32)],
        compiler_params=pltpu.CompilerParams(
            dimension_semantics=("parallel", "arbitrary"),
            vmem_limit_bytes=vmem_limit),
    )(x2)

    # Tiny per-channel finalize in plain jnp (O(N*C) elements).
    inv_m = 1.0 / float(N * S)
    ch_sum = row_sum.reshape(N, C).sum(axis=0)
    ch_sumsq = row_sumsq.reshape(N, C).sum(axis=0)
    mean = ch_sum * inv_m
    var = jnp.maximum(ch_sumsq * inv_m - mean * mean, 0.0)
    scale_c = gamma.reshape(C).astype(jnp.float32) * lax.rsqrt(var + eps)
    shift_c = beta.reshape(C).astype(jnp.float32) - mean * scale_c
    new_mm = momentum * mm.reshape(C).astype(jnp.float32) + (1.0 - momentum) * mean
    new_mv = momentum * mv.reshape(C).astype(jnp.float32) + (1.0 - momentum) * var

    # Per-row (N*C, 1) scale/shift so pass 2 stays in the (N*C, S) layout.
    scale_r = jnp.broadcast_to(scale_c[None, :], (N, C)).reshape(R, 1)
    shift_r = jnp.broadcast_to(shift_c[None, :], (N, C)).reshape(R, 1)

    # Pass 2: elementwise normalize; both axes parallel.
    y2 = pl.pallas_call(
        _affine_kernel,
        grid=grid,
        in_specs=[x_spec, r1_spec, r1_spec],
        out_specs=x_spec,
        out_shape=jax.ShapeDtypeStruct((R, S), x.dtype),
        compiler_params=pltpu.CompilerParams(
            dimension_semantics=("parallel", "parallel"),
            vmem_limit_bytes=vmem_limit),
    )(x2, scale_r, shift_r)

    return (y2.reshape(N, C, H, W),
            new_mm.reshape(1, C, 1, 1),
            new_mv.reshape(1, C, 1, 1))


def _batch_norm_2d_tiled(x, gamma, beta, mm, mv, eps, momentum,
                         tile_budget, vmem_limit):
    N, C = x.shape
    esize = np.dtype(x.dtype).itemsize
    budget_elems = max(8 * 128, tile_budget // esize)

    tc = _largest_tile(C, 128, max(128, budget_elems // 8))
    tm = _largest_tile(N, 8, max(8, budget_elems // tc))

    # Pass 1: grid (channel-blocks, row-blocks); reduction (rows) last / arbitrary.
    grid1 = (C // tc, N // tm)
    part_shape = jax.ShapeDtypeStruct((1, C), jnp.float32)
    ch_sum, ch_sumsq = pl.pallas_call(
        _stats_cols_kernel,
        grid=grid1,
        in_specs=[pl.BlockSpec((tm, tc), lambda j, i: (i, j))],
        out_specs=(pl.BlockSpec((1, tc), lambda j, i: (0, j)),
                   pl.BlockSpec((1, tc), lambda j, i: (0, j))),
        out_shape=(part_shape, part_shape),
        scratch_shapes=[pltpu.VMEM((1, tc), jnp.float32),
                        pltpu.VMEM((1, tc), jnp.float32)],
        compiler_params=pltpu.CompilerParams(
            dimension_semantics=("parallel", "arbitrary"),
            vmem_limit_bytes=vmem_limit),
    )(x)

    inv_m = 1.0 / float(N)
    mean = ch_sum * inv_m                         # (1, C)
    var = jnp.maximum(ch_sumsq * inv_m - mean * mean, 0.0)
    g = gamma.reshape(1, C).astype(jnp.float32)
    b = beta.reshape(1, C).astype(jnp.float32)
    scale = g * lax.rsqrt(var + eps)
    shift = b - mean * scale
    new_mm = momentum * mm.reshape(1, C).astype(jnp.float32) + (1.0 - momentum) * mean
    new_mv = momentum * mv.reshape(1, C).astype(jnp.float32) + (1.0 - momentum) * var

    # Pass 2.
    grid2 = (N // tm, C // tc)
    y = pl.pallas_call(
        _affine_kernel,
        grid=grid2,
        in_specs=[pl.BlockSpec((tm, tc), lambda i, j: (i, j)),
                  pl.BlockSpec((1, tc), lambda i, j: (0, j)),
                  pl.BlockSpec((1, tc), lambda i, j: (0, j))],
        out_specs=pl.BlockSpec((tm, tc), lambda i, j: (i, j)),
        out_shape=jax.ShapeDtypeStruct((N, C), x.dtype),
        compiler_params=pltpu.CompilerParams(
            dimension_semantics=("parallel", "parallel"),
            vmem_limit_bytes=vmem_limit),
    )(x, scale, shift)

    return y, new_mm, new_mv


def batch_norm_pallas(x, gamma, beta, moving_mean, moving_var,
                      eps=1e-5, momentum=0.9,
                      _force_tiled=False, _tile_budget=None):
    """Training-mode batch norm (matches the d2l `batch_norm` forward)."""
    assert x.ndim in (2, 4)
    budgets = _hw_budgets()
    tile_budget = budgets["tile_budget"] if _tile_budget is None else _tile_budget
    vmem_limit = budgets["vmem_limit"]

    # Fast-path gate: conservative estimate of VMEM footprint of the fused
    # kernel (in-buffer + out-buffer + f32 temporaries) vs the scoped limit.
    x_f32_bytes = int(np.prod(x.shape)) * 4
    use_fast = (not _force_tiled) and (4 * x_f32_bytes <= budgets["fast_budget"])

    if x.ndim == 4:
        N, C, H, W = x.shape
        if use_fast:
            x3 = x.reshape(N, C, H * W)
            g = gamma.reshape(1, C, 1).astype(jnp.float32)
            b = beta.reshape(1, C, 1).astype(jnp.float32)
            mm = moving_mean.reshape(1, C, 1).astype(jnp.float32)
            mv = moving_var.reshape(1, C, 1).astype(jnp.float32)
            y3, nmm, nmv = _batch_norm_fused(
                x3, (1, C, 1), (2, 0), g, b, mm, mv, eps, momentum, vmem_limit)
            return (y3.reshape(N, C, H, W),
                    nmm.reshape(1, C, 1, 1),
                    nmv.reshape(1, C, 1, 1))
        return _batch_norm_4d_tiled(x, gamma, beta, moving_mean, moving_var,
                                    eps, momentum, tile_budget, vmem_limit)

    N, C = x.shape
    if use_fast:
        g = gamma.reshape(1, C).astype(jnp.float32)
        b = beta.reshape(1, C).astype(jnp.float32)
        mm = moving_mean.reshape(1, C).astype(jnp.float32)
        mv = moving_var.reshape(1, C).astype(jnp.float32)
        return _batch_norm_fused(x, (1, C), (0,), g, b, mm, mv,
                                 eps, momentum, vmem_limit)
    return _batch_norm_2d_tiled(x, gamma, beta, moving_mean, moving_var,
                                eps, momentum, tile_budget, vmem_limit)


class BatchNormPallas:
    """Mirror of the PyTorch BatchNorm module (training-mode forward)."""

    def __init__(self, num_features, num_dims):
        shape = (1, num_features) if num_dims == 2 else (1, num_features, 1, 1)
        self.gamma = jnp.ones(shape, jnp.float32)
        self.beta = jnp.zeros(shape, jnp.float32)
        self.moving_mean = jnp.zeros(shape, jnp.float32)
        self.moving_var = jnp.ones(shape, jnp.float32)

    def __call__(self, x):
        y, self.moving_mean, self.moving_var = batch_norm_pallas(
            x, self.gamma, self.beta, self.moving_mean, self.moving_var,
            eps=1e-5, momentum=0.9)
        return y


def _reference(x, gamma, beta, mm, mv, eps=1e-5, momentum=0.9):
    axes = (0, 2, 3) if x.ndim == 4 else (0,)
    mean = x.mean(axis=axes, keepdims=True)
    var = ((x - mean) ** 2).mean(axis=axes, keepdims=True)
    x_hat = (x - mean) / jnp.sqrt(var + eps)
    y = gamma * x_hat + beta
    return (y,
            momentum * mm + (1.0 - momentum) * mean,
            momentum * mv + (1.0 - momentum) * var)


if __name__ == "__main__":
    key = jax.random.PRNGKey(0)
    k1, k2, k3, k4, k5, k6, k7, k8 = jax.random.split(key, 8)
    TOL = dict(atol=1e-4, rtol=1e-4)

    # --- 1. 4-D NCHW, fused single-call fast path (module default params) ---
    N, C, H, W = 2, 4, 16, 16
    x4 = jax.random.normal(k1, (N, C, H, W), jnp.float32) * 2.0 + 0.5
    bn4 = BatchNormPallas(num_features=C, num_dims=4)
    y4 = jax.block_until_ready(bn4(x4))
    y4_ref, mm4_ref, mv4_ref = _reference(
        x4, jnp.ones((1, C, 1, 1)), jnp.zeros((1, C, 1, 1)),
        jnp.zeros((1, C, 1, 1)), jnp.ones((1, C, 1, 1)))
    assert y4.shape == (N, C, H, W)
    np.testing.assert_allclose(np.asarray(y4), np.asarray(y4_ref), **TOL)
    np.testing.assert_allclose(np.asarray(bn4.moving_mean), np.asarray(mm4_ref), **TOL)
    np.testing.assert_allclose(np.asarray(bn4.moving_var), np.asarray(mv4_ref), **TOL)

    # --- 2. 2-D (N, C), fused fast path ---
    N2, C2 = 16, 32
    x2 = jax.random.normal(k2, (N2, C2), jnp.float32) * 1.5 - 0.25
    bn2 = BatchNormPallas(num_features=C2, num_dims=2)
    y2 = jax.block_until_ready(bn2(x2))
    y2_ref, mm2_ref, mv2_ref = _reference(
        x2, jnp.ones((1, C2)), jnp.zeros((1, C2)),
        jnp.zeros((1, C2)), jnp.ones((1, C2)))
    assert y2.shape == (N2, C2)
    np.testing.assert_allclose(np.asarray(y2), np.asarray(y2_ref), **TOL)
    np.testing.assert_allclose(np.asarray(bn2.moving_mean), np.asarray(mm2_ref), **TOL)
    np.testing.assert_allclose(np.asarray(bn2.moving_var), np.asarray(mv2_ref), **TOL)

    # --- 3. 4-D tiled two-pass path (forced, tiny tile budget => multi-block grid) ---
    N3, C3, H3, W3 = 4, 8, 32, 32
    x4b = jax.random.normal(k3, (N3, C3, H3, W3), jnp.float32) * 1.3 + 0.7
    g3 = 0.5 + jax.random.uniform(k4, (1, C3, 1, 1), jnp.float32)
    b3 = jax.random.normal(k5, (1, C3, 1, 1), jnp.float32) * 0.1
    mm3 = jax.random.normal(k6, (1, C3, 1, 1), jnp.float32) * 0.2
    mv3 = 1.0 + jax.random.uniform(k7, (1, C3, 1, 1), jnp.float32)
    y3, nmm3, nmv3 = batch_norm_pallas(x4b, g3, b3, mm3, mv3,
                                       _force_tiled=True, _tile_budget=8 * 1024)
    jax.block_until_ready(y3)
    y3_ref, mm3_ref, mv3_ref = _reference(x4b, g3, b3, mm3, mv3)
    np.testing.assert_allclose(np.asarray(y3), np.asarray(y3_ref), **TOL)
    np.testing.assert_allclose(np.asarray(nmm3), np.asarray(mm3_ref), **TOL)
    np.testing.assert_allclose(np.asarray(nmv3), np.asarray(mv3_ref), **TOL)

    # --- 4. 2-D tiled two-pass path (forced) ---
    N4, C4 = 64, 256
    x2b = jax.random.normal(k8, (N4, C4), jnp.float32) * 0.8 + 0.3
    g4 = jnp.full((1, C4), 1.2, jnp.float32)
    b4 = jnp.full((1, C4), -0.1, jnp.float32)
    mm4i = jnp.zeros((1, C4), jnp.float32)
    mv4i = jnp.ones((1, C4), jnp.float32)
    y4b, nmm4, nmv4 = batch_norm_pallas(x2b, g4, b4, mm4i, mv4i,
                                        _force_tiled=True, _tile_budget=8 * 1024)
    jax.block_until_ready(y4b)
    y4b_ref, mm4b_ref, mv4b_ref = _reference(x2b, g4, b4, mm4i, mv4i)
    np.testing.assert_allclose(np.asarray(y4b), np.asarray(y4b_ref), **TOL)
    np.testing.assert_allclose(np.asarray(nmm4), np.asarray(mm4b_ref), **TOL)
    np.testing.assert_allclose(np.asarray(nmv4), np.asarray(mv4b_ref), **TOL)

    print("KERNEL_OK")
</pallas_src>

<mosaic_0001>
module attributes {stable_mosaic.version = 11 : i64} {
  func.func @_fused_kernel(%arg0: memref<2x4x256xf32, #tpu.memory_space<vmem>>, %arg1: memref<1x4x1xf32, #tpu.memory_space<vmem>>, %arg2: memref<1x4x1xf32, #tpu.memory_space<vmem>>, %arg3: memref<1x4x1xf32, #tpu.memory_space<vmem>>, %arg4: memref<1x4x1xf32, #tpu.memory_space<vmem>>, %arg5: memref<2x4x256xf32, #tpu.memory_space<vmem>>, %arg6: memref<1x4x1xf32, #tpu.memory_space<vmem>>, %arg7: memref<1x4x1xf32, #tpu.memory_space<vmem>>) attributes {dimension_semantics = [], scalar_prefetch = 0 : i64, scratch_operands = 0 : i64, tpu.core_type = #tpu.core_type<tc>} {
    %c0 = arith.constant 0 : index
    %c0_0 = arith.constant 0 : index
    %c0_1 = arith.constant 0 : index
    %0 = vector.load %arg0[%c0, %c0_0, %c0_1] : memref<2x4x256xf32, #tpu.memory_space<vmem>>, vector<2x4x256xf32>
    %1 = arith.mulf %0, %0 : vector<2x4x256xf32>
    %cst = arith.constant dense<0.000000e+00> : vector<2x4xf32>
    %2 = vector.multi_reduction <add>, %0, %cst [2] : vector<2x4x256xf32> to vector<2x4xf32>
    %3 = vector.shape_cast %2 : vector<2x4xf32> to vector<2x4x1xf32>
    %cst_2 = arith.constant dense<0.000000e+00> : vector<2x4xf32>
    %4 = vector.multi_reduction <add>, %1, %cst_2 [2] : vector<2x4x256xf32> to vector<2x4xf32>
    %5 = vector.shape_cast %4 : vector<2x4xf32> to vector<2x4x1xf32>
    %cst_3 = arith.constant dense<0.000000e+00> : vector<4x1xf32>
    %6 = vector.multi_reduction <add>, %3, %cst_3 [0] : vector<2x4x1xf32> to vector<4x1xf32>
    %7 = vector.shape_cast %6 : vector<4x1xf32> to vector<1x4x1xf32>
    %cst_4 = arith.constant dense<0.000000e+00> : vector<4x1xf32>
    %8 = vector.multi_reduction <add>, %5, %cst_4 [0] : vector<2x4x1xf32> to vector<4x1xf32>
    %9 = vector.shape_cast %8 : vector<4x1xf32> to vector<1x4x1xf32>
    %cst_5 = arith.constant 0.001953125 : f32
    %10 = vector.broadcast %cst_5 : f32 to vector<1x4x1xf32>
    %11 = arith.mulf %7, %10 : vector<1x4x1xf32>
    %cst_6 = arith.constant 0.001953125 : f32
    %12 = vector.broadcast %cst_6 : f32 to vector<1x4x1xf32>
    %13 = arith.mulf %9, %12 : vector<1x4x1xf32>
    %14 = arith.mulf %11, %11 : vector<1x4x1xf32>
    %15 = arith.subf %13, %14 : vector<1x4x1xf32>
    %cst_7 = arith.constant 0.000000e+00 : f32
    %16 = vector.broadcast %cst_7 : f32 to vector<1x4x1xf32>
    %17 = arith.maximumf %15, %16 : vector<1x4x1xf32>
    %c0_8 = arith.constant 0 : index
    %c0_9 = arith.constant 0 : index
    %c0_10 = arith.constant 0 : index
    %18 = vector.load %arg1[%c0_8, %c0_9, %c0_10] : memref<1x4x1xf32, #tpu.memory_space<vmem>>, vector<1x4x1xf32>
    %cst_11 = arith.constant 9.99999974E-6 : f32
    %19 = vector.broadcast %cst_11 : f32 to vector<1x4x1xf32>
    %20 = arith.addf %17, %19 : vector<1x4x1xf32>
    %21 = math.rsqrt %20 : vector<1x4x1xf32>
    %22 = arith.mulf %18, %21 : vector<1x4x1xf32>
    %c0_12 = arith.constant 0 : index
    %c0_13 = arith.constant 0 : index
    %c0_14 = arith.constant 0 : index
    %23 = vector.load %arg2[%c0_12, %c0_13, %c0_14] : memref<1x4x1xf32, #tpu.memory_space<vmem>>, vector<1x4x1xf32>
    %24 = arith.mulf %11, %22 : vector<1x4x1xf32>
    %25 = arith.subf %23, %24 : vector<1x4x1xf32>
    %26 = vector.broadcast %22 : vector<1x4x1xf32> to vector<2x4x256xf32>
    %27 = arith.mulf %0, %26 : vector<2x4x256xf32>
    %28 = vector.broadcast %25 : vector<1x4x1xf32> to vector<2x4x256xf32>
    %29 = arith.addf %27, %28 : vector<2x4x256xf32>
    %c0_15 = arith.constant 0 : index
    %c0_16 = arith.constant 0 : index
    %c0_17 = arith.constant 0 : index
    %30 = vector.load %arg5[%c0_15, %c0_16, %c0_17] : memref<2x4x256xf32, #tpu.memory_space<vmem>>, vector<2x4x256xf32>
    tpu.vector_store %arg5[%c0_15, %c0_16, %c0_17], %29 {strides = array<i32>} : memref<2x4x256xf32, #tpu.memory_space<vmem>>, vector<2x4x256xf32>,
    %c0_18 = arith.constant 0 : index
    %c0_19 = arith.constant 0 : index
    %c0_20 = arith.constant 0 : index
    %31 = vector.load %arg3[%c0_18, %c0_19, %c0_20] : memref<1x4x1xf32, #tpu.memory_space<vmem>>, vector<1x4x1xf32>
    %cst_21 = arith.constant 0.899999976 : f32
    %32 = vector.broadcast %cst_21 : f32 to vector<1x4x1xf32>
    %33 = arith.mulf %32, %31 : vector<1x4x1xf32>
    %cst_22 = arith.constant 1.000000e-01 : f32
    %34 = vector.broadcast %cst_22 : f32 to vector<1x4x1xf32>
    %35 = arith.mulf %34, %11 : vector<1x4x1xf32>
    %36 = arith.addf %33, %35 : vector<1x4x1xf32>
    %c0_23 = arith.constant 0 : index
    %c0_24 = arith.constant 0 : index
    %c0_25 = arith.constant 0 : index
    %37 = vector.load %arg6[%c0_23, %c0_24, %c0_25] : memref<1x4x1xf32, #tpu.memory_space<vmem>>, vector<1x4x1xf32>
    tpu.vector_store %arg6[%c0_23, %c0_24, %c0_25], %36 {strides = array<i32>} : memref<1x4x1xf32, #tpu.memory_space<vmem>>, vector<1x4x1xf32>,
    %c0_26 = arith.constant 0 : index
    %c0_27 = arith.constant 0 : index
    %c0_28 = arith.constant 0 : index
    %38 = vector.load %arg4[%c0_26, %c0_27, %c0_28] : memref<1x4x1xf32, #tpu.memory_space<vmem>>, vector<1x4x1xf32>
    %cst_29 = arith.constant 0.899999976 : f32
    %39 = vector.broadcast %cst_29 : f32 to vector<1x4x1xf32>
    %40 = arith.mulf %39, %38 : vector<1x4x1xf32>
    %cst_30 = arith.constant 1.000000e-01 : f32
    %41 = vector.broadcast %cst_30 : f32 to vector<1x4x1xf32>
    %42 = arith.mulf %41, %17 : vector<1x4x1xf32>
    %43 = arith.addf %40, %42 : vector<1x4x1xf32>
    %c0_31 = arith.constant 0 : index
    %c0_32 = arith.constant 0 : index
    %c0_33 = arith.constant 0 : index
    %44 = vector.load %arg7[%c0_31, %c0_32, %c0_33] : memref<1x4x1xf32, #tpu.memory_space<vmem>>, vector<1x4x1xf32>
    tpu.vector_store %arg7[%c0_31, %c0_32, %c0_33], %43 {strides = array<i32>} : memref<1x4x1xf32, #tpu.memory_space<vmem>>, vector<1x4x1xf32>,
    return
  }
}

</mosaic_0001>

<llo_original>
// kernel: tpu_custom_call.1
$region0: #{tpu_custom_call.1}
  #allocation0 [shape = 'u32[]', space=smem, size = 0x4, offset = 0x4, fixed_abs, tag = 'smem constant byte address 0x4 - core index']
  #allocation1 [shape = 'u32[144,128]{1,0:T(1,128)}', space=vmem, size = 0x12000, scoped, tag = 'internal scratch']
  %s0 = inlined_call_operand.vmem [shape: f32[2,4,256], index: 0, kind: input, shape index: {}]
  %s1 = inlined_call_operand.vmem [shape: f32[1,4,1], index: 1, kind: input, shape index: {}]
  %s2 = inlined_call_operand.vmem [shape: f32[1,4,1], index: 2, kind: input, shape index: {}]
  %s3 = inlined_call_operand.vmem [shape: f32[1,4,1], index: 3, kind: input, shape index: {}]
  %s4 = inlined_call_operand.vmem [shape: f32[1,4,1], index: 4, kind: input, shape index: {}]
  %s5 = inlined_call_operand.hbm [shape: f32[2,4,256], index: 5, kind: output, shape index: {0}]
  %s6 = inlined_call_operand.vmem [shape: f32[1,4,1], index: 6, kind: output, shape index: {1}]
  %s7 = inlined_call_operand.vmem [shape: f32[1,4,1], index: 7, kind: output, shape index: {2}]
  %8 = xla_tuple %s5, %s6, %s7
  %s9 = sld [smem:[#allocation0]]
  $region46: #{tpu_custom_call.1} parent=0
    _
  %s11 = ssub.s32 1, %s9
  %s12 = scalar_select 0, %s11, %s9
  $region1: #{tpu_custom_call.1} parent=0
    #allocation2 [shape = 'u8[8192]{0}', space=vmem, size = 0x2000, scoped, tag = 'output window, operand 0, single buffered']
    #allocation3 [shape = 's32[1]{0}', space=sflag, size = 0x4, scoped, tag = 'scoped memory for tpu_custom_call.1']
    %13 = vsyncpa [#allocation3], 0
    // Predicated region
    $region2: #{tpu_custom_call.1} parent=1 // pred_check
      _
    $region3: #{tpu_custom_call.1} parent=1 // pred_check_branch
      %15 = sbr.rel (0) target = $region5
    $region4: #{tpu_custom_call.1} parent=1 // pred_region
      _
    $region5: #{tpu_custom_call.1} parent=1 // pred_fallthru
      _
    // Predicated region
    $region6: #{tpu_custom_call.1} parent=1 // pred_check
      _
    $region7: #{tpu_custom_call.1} parent=1 // pred_check_branch
      %17 = sbr.rel (0) target = $region9
    $region8: #{tpu_custom_call.1} parent=1 // pred_region
      _
    $region9: #{tpu_custom_call.1} parent=1 // pred_fallthru
      _
    // Predicated region
    $region10: #{tpu_custom_call.1} parent=1 // pred_check
      _
    $region11: #{tpu_custom_call.1} parent=1 // pred_check_branch
      %19 = sbr.rel (0) target = $region13
    $region12: #{tpu_custom_call.1} parent=1 // pred_region
      _
    $region13: #{tpu_custom_call.1} parent=1 // pred_fallthru
      _
    // Predicated region
    $region14: #{tpu_custom_call.1} parent=1 // pred_check
      _
    $region15: #{tpu_custom_call.1} parent=1 // pred_check_branch
      %21 = sbr.rel (0) target = $region17
    $region16: #{tpu_custom_call.1} parent=1 // pred_region
      _
    $region17: #{tpu_custom_call.1} parent=1 // pred_fallthru
      _
    // Predicated region
    $region18: #{tpu_custom_call.1} parent=1 // pred_check
      _
    $region19: #{tpu_custom_call.1} parent=1 // pred_check_branch
      %23 = sbr.rel (0) target = $region21
    $region20: #{tpu_custom_call.1} parent=1 // pred_region
      _
    $region21: #{tpu_custom_call.1} parent=1 // pred_fallthru
      _
    %v24 = vld [vmem:[%s0] sm:$0xff]
    %v25 = vld [vmem:[%s0 + $0x8] sm:$0xff]
    %v26 = vmul.f32 %v24, %v24
    %v27 = vmul.f32 %v25, %v25
    %v30 = vcombine.high %v24, %v24
    %v31 = vcombine.high %v25, %v25
    %vm34 = vcmask 1043456
    %v35 = vsel %vm34, %v24, 0.0
    %v36 = vsel %vm34, %v30, 0.0
    %v37 = vadd.f32 %v35, %v36
    %38 = vadd.xlane.f32.xlu0 %v37
    %v39 = vpop.xlane.xlu0 %38
    %v40 = vsel %vm34, %v25, 0.0
    %v41 = vsel %vm34, %v31, 0.0
    %v42 = vadd.f32 %v40, %v41
    %43 = vadd.xlane.f32.xlu0 %v42
    %v44 = vpop.xlane.xlu0 %43
    %v47 = vcombine.high %v26, %v26
    %v48 = vcombine.high %v27, %v27
    %v51 = vsel %vm34, %v26, 0.0
    %v52 = vsel %vm34, %v47, 0.0
    %v53 = vadd.f32 %v51, %v52
    %54 = vadd.xlane.f32.xlu0 %v53
    %v55 = vpop.xlane.xlu0 %54
    %v56 = vsel %vm34, %v27, 0.0
    %v57 = vsel %vm34, %v48, 0.0
    %v58 = vadd.f32 %v56, %v57
    %59 = vadd.xlane.f32.xlu0 %v58
    %v60 = vpop.xlane.xlu0 %59
    %v61 = vsel %vm34, %v39, 0.0
    %v62 = vsel %vm34, %v44, 0.0
    %v63 = vadd.f32 %v61, %v62
    %v64 = vsel %vm34, %v55, 0.0
    %v65 = vsel %vm34, %v60, 0.0
    %v66 = vadd.f32 %v64, %v65
    %v67 = vmul.f32 %v63, 0.001953125
    %v68 = vmul.f32 %v66, 0.001953125
    %v69 = vmul.f32 %v67, %v67
    %v70 = vsub.f32 %v68, %v69
    %v71 = vmax.f32 %v70, 0.0
    %v72 = vld [vmem:[%s1] sm:$0xf]
    %v73 = vadd.f32 %v71, 1e-05
    %v74 = vrsqrt.pop %v73
    %v75 = vmul.f32 %v72, %v74
    %v76 = vld [vmem:[%s2] sm:$0xf]
    %v77 = vmul.f32 %v67, %v75
    %v78 = vsub.f32 %v76, %v77
    %80 = vset.pattern.permute.xlu0 0
    %81 = vperm.xlu0 %80, %v75
    %v82 = vpop.permute.xlu0 %81
    %v84 = vunpack.c.l.s4 839922192
    %v85 = vunpack.c.0.s8 %v84
    %v86 = vlaneseq
    %v87 = vshrl.u32 %v86, 7
    %v88 = vsub.s32 %v85, %v87
    %v89 = vrot.slane %v82, %v88
    %v91 = vmul.f32 %v24, %v89
    %v92 = vmul.f32 %v25, %v89
    %94 = vset.pattern.permute.xlu0 0
    %95 = vperm.xlu0 %94, %v78
    %v96 = vpop.permute.xlu0 %95
    %v98 = vunpack.c.l.s4 839922192
    %v99 = vunpack.c.0.s8 %v98
    %v100 = vlaneseq
    %v101 = vshrl.u32 %v100, 7
    %v102 = vsub.s32 %v99, %v101
    %v103 = vrot.slane %v96, %v102
    %v105 = vadd.f32 %v91, %v103
    %v106 = vadd.f32 %v92, %v103
    %107 = vst [vmem:[#allocation2] sm:$0xff] %v105
    %108 = vst [vmem:[#allocation2 + $0x8] sm:$0xff] %v106
    %v109 = vld [vmem:[%s3] sm:$0xf]
    %v110 = vmul.f32 %v109, 0.9
    %v111 = vmul.f32 %v67, 0.1
    %v112 = vadd.f32 %v110, %v111
    %vm113 = vcmask 3072
    %114 = vst.msk [vmem:[%s6] sm:$0xf] %vm113, %v112
    %v115 = vld [vmem:[%s4] sm:$0xf]
    %v116 = vmul.f32 %v115, 0.9
    %v117 = vmul.f32 %v71, 0.1
    %v118 = vadd.f32 %v116, %v117
    %119 = vst.msk [vmem:[%s7] sm:$0xf] %vm113, %v118
    // Predicated region
    $region22: #{tpu_custom_call.1} parent=1 // pred_check
      _
    $region23: #{tpu_custom_call.1} parent=1 // pred_check_branch
      %121 = sbr.rel (0) target = $region25
    $region24: #{tpu_custom_call.1} parent=1 // pred_region
      %s123 = ssub.s32 256, 256
      %124 = vsyncadd [#allocation3], %s123
      %s125 = sshll.u32 [#allocation2], 4
      %s126 = int_to_ptr.vmem [resolvable:$true] %s125
      %131 = dma.vmem_to_hbm [thread:$0]  %s126, 256, %s5, [#allocation3], 128, 128, 8
    $region25: #{tpu_custom_call.1} parent=1 // pred_fallthru
      _
    // Predicated region
    $region26: #{tpu_custom_call.1} parent=1 // pred_check
      _
    $region27: #{tpu_custom_call.1} parent=1 // pred_check_branch
      %133 = sbr.rel (0) target = $region29
    $region28: #{tpu_custom_call.1} parent=1 // pred_region
      _
    $region29: #{tpu_custom_call.1} parent=1 // pred_fallthru
      _
    // Predicated region
    $region30: #{tpu_custom_call.1} parent=1 // pred_check
      _
    $region31: #{tpu_custom_call.1} parent=1 // pred_check_branch
      %135 = sbr.rel (0) target = $region33
    $region32: #{tpu_custom_call.1} parent=1 // pred_region
      _
    $region33: #{tpu_custom_call.1} parent=1 // pred_fallthru
      _
    // Predicated region
    $region34: #{tpu_custom_call.1} parent=1 // pred_check
      _
    $region35: #{tpu_custom_call.1} parent=1 // pred_check_branch
      %137 = sbr.rel (0) target = $region37
    $region36: #{tpu_custom_call.1} parent=1 // pred_region
      %138 = dma.done [#allocation3], 256
    $region37: #{tpu_custom_call.1} parent=1 // pred_fallthru
      _
    // Predicated region
    $region38: #{tpu_custom_call.1} parent=1 // pred_check
      _
    $region39: #{tpu_custom_call.1} parent=1 // pred_check_branch
      %140 = sbr.rel (0) target = $region41
    $region40: #{tpu_custom_call.1} parent=1 // pred_region
      _
    $region41: #{tpu_custom_call.1} parent=1 // pred_fallthru
      _
    // Predicated region
    $region42: #{tpu_custom_call.1} parent=1 // pred_check
      _
    $region43: #{tpu_custom_call.1} parent=1 // pred_check_branch
      %142 = sbr.rel (0) target = $region45
    $region44: #{tpu_custom_call.1} parent=1 // pred_region
      _
    $region45: #{tpu_custom_call.1} parent=1 // pred_fallthru
      _
    %143 = vsyncpa [#allocation3], 1

</llo_original>
